<compile_context>
chip_gen: v7x
topology: tpu7x:2x2x1
jax: 0.10.0
libtpu: 0.0.40
codegen_flags: <defaults>
</compile_context>

<pallas_src>
import jax
import jax.numpy as jnp
from jax.experimental import pallas as pl
from jax.experimental.pallas import tpu as pltpu

_LANES = 128


def dh_kernel(theta_ref, sa_ref, ca_ref, sb_ref, cb_ref, a_ref, b_ref, d_ref,
              out_ref):
    """theta_ref: (tr, 128) f32 plane of joint angles (flat b*N_pad+n layout).

    sa/ca/sb/cb/a/b/d refs: (8, 128) lane-periodic parameter blocks (resident
    across the grid; only row 0 is used).  out_ref: (16, tr, 128) where
    out_ref[4*i+j] holds entry (i, j) of Tz(theta, d) @ Ty(beta, b) @ Tx(alpha, a).
    """
    shape = theta_ref.shape                     # (tr, 128)
    theta = theta_ref[...]
    st = jnp.sin(theta)                         # only transcendentals in-kernel
    ct = jnp.cos(theta)

    def lane_param(ref):
        # lane-periodic (1, 128) row, sublane-broadcast to the full tile (hoisted)
        return jnp.broadcast_to(ref[0:1, :], shape)

    sa = lane_param(sa_ref)
    ca = lane_param(ca_ref)
    sb = lane_param(sb_ref)
    cb = lane_param(cb_ref)
    a = lane_param(a_ref)
    b = lane_param(b_ref)
    d = lane_param(d_ref)

    ct_cb = ct * cb
    st_cb = st * cb
    ct_sb = ct * sb
    st_sb = st * sb

    zero = jnp.zeros(shape, jnp.float32)
    one = jnp.ones(shape, jnp.float32)

    # Closed form of Tz @ Ty @ Tx (term-by-term identical to the matmul
    # reference; dropped terms are exact zeros/ones).  Store-as-you-go.
    out_ref[0, :, :] = ct_cb                       # (0,0)
    out_ref[1, :, :] = ct_sb * sa - st * ca        # (0,1)
    out_ref[2, :, :] = ct_sb * ca + st * sa        # (0,2)
    out_ref[3, :, :] = ct_cb * a - st * b          # (0,3)
    out_ref[4, :, :] = st_cb                       # (1,0)
    out_ref[5, :, :] = st_sb * sa + ct * ca        # (1,1)
    out_ref[6, :, :] = st_sb * ca - ct * sa        # (1,2)
    out_ref[7, :, :] = st_cb * a + ct * b          # (1,3)
    out_ref[8, :, :] = -sb                         # (2,0)
    out_ref[9, :, :] = cb * sa                     # (2,1)
    out_ref[10, :, :] = cb * ca                    # (2,2)
    out_ref[11, :, :] = d - sb * a                 # (2,3)
    out_ref[12, :, :] = zero                       # (3,0)
    out_ref[13, :, :] = zero                       # (3,1)
    out_ref[14, :, :] = zero                       # (3,2)
    out_ref[15, :, :] = one                        # (3,3)


def dh_layer_planes(theta, alpha, beta, a, b, d, *, tile_rows=1024):
    """Run the kernel; return (planes, N_pad).

    planes: (16, rows_padded, 128) f32 — entry plane k = 4*i + j of the DH
    matrix for the flat element index b*N_pad + n located at
    (index // 128, index % 128).  Downstream Pallas consumers should use this
    layout directly and skip the (B, N, 4, 4) assembly.
    """
    B, N = theta.shape
    f32 = jnp.float32
    if N > _LANES:
        # TODO(synk): joint counts > 128 need per-row (not per-lane) param
        # blocks; DH robot arms never hit this.
        raise NotImplementedError("DHLayer Pallas kernel supports N <= 128 joints")

    N_pad = pl.next_power_of_2(N)                 # divides 128 for N <= 128
    total = B * N_pad

    rows = ((pl.cdiv(total, _LANES) + 7) // 8) * 8          # sublane multiple
    # keep >= 2 grid tiles when there is enough work (pipelining / megacore)
    tr_cap = rows if rows < 16 else max(8, ((rows // 2) // 8) * 8)
    tr = max(8, (min(tile_rows, tr_cap) // 8) * 8)          # (8,128) rule
    rows_padded = ((rows + tr - 1) // tr) * tr
    padded = rows_padded * _LANES

    # theta: the only full-size, lane-dense plane (zero padded -> finite tail)
    theta_p = jnp.pad(theta.astype(f32), ((0, 0), (0, N_pad - N)))
    theta_plane = jnp.pad(theta_p.reshape(total), (0, padded - total))
    theta_plane = theta_plane.reshape(rows_padded, _LANES)

    # per-joint params -> tiny lane-periodic (8, 128) blocks, resident in VMEM
    def lane_block(v):
        v = jnp.pad(jnp.asarray(v, f32).reshape(-1), (0, N_pad - N))
        v = jnp.tile(v, _LANES // N_pad)                    # (128,)
        return jnp.broadcast_to(v[None, :], (8, _LANES))

    alpha_v = alpha.reshape(-1).astype(f32)
    beta_v = beta.reshape(-1).astype(f32)
    params = (lane_block(jnp.sin(alpha_v)), lane_block(jnp.cos(alpha_v)),
              lane_block(jnp.sin(beta_v)), lane_block(jnp.cos(beta_v)),
              lane_block(a), lane_block(b), lane_block(d))

    grid = (rows_padded // tr,)
    theta_spec = pl.BlockSpec((tr, _LANES), lambda i: (i, 0))
    param_spec = pl.BlockSpec((8, _LANES), lambda i: (0, 0))    # resident block
    out_spec = pl.BlockSpec((16, tr, _LANES), lambda i: (0, i, 0))

    planes = pl.pallas_call(
        dh_kernel,
        grid=grid,
        in_specs=[theta_spec] + [param_spec] * 7,
        out_specs=out_spec,
        out_shape=jax.ShapeDtypeStruct((16, rows_padded, _LANES), f32),
        compiler_params=pltpu.CompilerParams(
            dimension_semantics=("parallel",),      # pipelining + v7x megacore
            vmem_limit_bytes=40 * 1024 * 1024,      # headroom over ~24 MiB @ tr=1024
        ),
    )(theta_plane, *params)
    return planes, N_pad


def dh_layer_forward(theta, alpha, beta, a, b, d, *, tile_rows=1024):
    """theta: (B, N); alpha/beta/a/b/d: (N, 1) params. Returns (B, N, 4, 4) f32."""
    B, N = theta.shape
    planes, N_pad = dh_layer_planes(theta, alpha, beta, a, b, d,
                                    tile_rows=tile_rows)
    total = B * N_pad
    padded = planes.shape[1] * planes.shape[2]
    # Single fused XLA transpose+slice+reshape (module contract only; Pallas
    # consumers should use dh_layer_planes() and skip this round trip).
    flat = planes.reshape(16, padded)[:, :total]            # (16, B*N_pad)
    dh = jnp.transpose(flat).reshape(B, N_pad, 4, 4)
    return dh[:, :N]


dh_layer_forward_jit = jax.jit(dh_layer_forward, static_argnames=("tile_rows",))


def ref_dh(theta, alpha, beta, a, b, d):
    """Pure-JAX reference built the same way as the PyTorch module (matmuls)."""
    B, N = theta.shape

    def T(unit, angle, transl):
        u = jnp.asarray(unit, jnp.float32)
        K = jnp.array([[0., -unit[2], unit[1]],
                       [unit[2], 0., -unit[0]],
                       [-unit[1], unit[0], 0.]], jnp.float32)
        outer = jnp.outer(u, u)
        eye = jnp.eye(3, dtype=jnp.float32)
        rot = (K * jnp.sin(angle)[..., None, None]
               + (eye - outer) * jnp.cos(angle)[..., None, None]
               + outer)                                      # (B, N, 3, 3)
        trans = (u * transl[..., None])[..., :, None]        # (B, N, 3, 1)
        top = jnp.concatenate([rot, trans], axis=-1)         # (B, N, 3, 4)
        bot = jnp.broadcast_to(jnp.array([0., 0., 0., 1.], jnp.float32),
                               (B, N, 1, 4))
        return jnp.concatenate([top, bot], axis=-2)          # (B, N, 4, 4)

    bc = lambda v: jnp.broadcast_to(v.reshape(1, N), (B, N))
    Tz = T((0., 0., 1.), theta, bc(d))
    Ty = T((0., 1., 0.), bc(beta), bc(b))
    Tx = T((1., 0., 0.), bc(alpha), bc(a))
    hp = jax.lax.Precision.HIGHEST
    return jnp.matmul(jnp.matmul(Tz, Ty, precision=hp), Tx, precision=hp)


if __name__ == "__main__":
    key = jax.random.PRNGKey(0)
    k_theta, k_alpha, k_beta, k_a, k_b, k_d = jax.random.split(key, 6)

    # -------- case 1: module-sized shapes (batch=2, joints=8) --------
    B, N = 2, 8
    theta = jax.random.uniform(k_theta, (B, N), jnp.float32, -jnp.pi, jnp.pi)
    # params mimic (torch.rand(N, 1) - 0.5) * 1  ->  U[-0.5, 0.5)
    alpha = jax.random.uniform(k_alpha, (N, 1), jnp.float32, -0.5, 0.5)
    beta = jax.random.uniform(k_beta, (N, 1), jnp.float32, -0.5, 0.5)
    a = jax.random.uniform(k_a, (N, 1), jnp.float32, -0.5, 0.5)
    b = jax.random.uniform(k_b, (N, 1), jnp.float32, -0.5, 0.5)
    d = jax.random.uniform(k_d, (N, 1), jnp.float32, -0.5, 0.5)

    dh = jax.block_until_ready(dh_layer_forward_jit(theta, alpha, beta, a, b, d))
    ref = jax.block_until_ready(ref_dh(theta, alpha, beta, a, b, d))
    assert dh.shape == (B, N, 4, 4), dh.shape
    assert jnp.allclose(dh, ref, rtol=1e-5, atol=1e-5), float(
        jnp.max(jnp.abs(dh - ref)))

    # -------- case 2: multi-tile grid + joint padding (N_pad > N) path ------
    B2, N2 = 48, 30                      # N_pad = 32, 2 row-tiles at tile_rows=8
    theta2 = jax.random.uniform(k_theta, (B2, N2), jnp.float32, -jnp.pi, jnp.pi)
    alpha2 = jax.random.uniform(k_alpha, (N2, 1), jnp.float32, -0.5, 0.5)
    beta2 = jax.random.uniform(k_beta, (N2, 1), jnp.float32, -0.5, 0.5)
    a2 = jax.random.uniform(k_a, (N2, 1), jnp.float32, -0.5, 0.5)
    b2 = jax.random.uniform(k_b, (N2, 1), jnp.float32, -0.5, 0.5)
    d2 = jax.random.uniform(k_d, (N2, 1), jnp.float32, -0.5, 0.5)

    dh2 = jax.block_until_ready(
        dh_layer_forward_jit(theta2, alpha2, beta2, a2, b2, d2, tile_rows=8))
    ref2 = jax.block_until_ready(ref_dh(theta2, alpha2, beta2, a2, b2, d2))
    assert dh2.shape == (B2, N2, 4, 4), dh2.shape
    assert jnp.allclose(dh2, ref2, rtol=1e-5, atol=1e-5), float(
        jnp.max(jnp.abs(dh2 - ref2)))

    print("KERNEL_OK")
</pallas_src>

<mosaic_0001>
module attributes {stable_mosaic.version = 11 : i64} {
  func.func @dh_kernel(%arg0: i32, %arg1: memref<8x128xf32, #tpu.memory_space<vmem>>, %arg2: memref<8x128xf32, #tpu.memory_space<vmem>>, %arg3: memref<8x128xf32, #tpu.memory_space<vmem>>, %arg4: memref<8x128xf32, #tpu.memory_space<vmem>>, %arg5: memref<8x128xf32, #tpu.memory_space<vmem>>, %arg6: memref<8x128xf32, #tpu.memory_space<vmem>>, %arg7: memref<8x128xf32, #tpu.memory_space<vmem>>, %arg8: memref<8x128xf32, #tpu.memory_space<vmem>>, %arg9: memref<16x8x128xf32, #tpu.memory_space<vmem>>) attributes {dimension_semantics = [#tpu.dimension_semantics<parallel>], iteration_bounds = array<i64: 1>, scalar_prefetch = 0 : i64, scratch_operands = 0 : i64, tpu.core_type = #tpu.core_type<tc>, window_params = [{transform_indices = @transform_0, window_bounds = array<i64: 8, 128>}, {pipeline_mode = #tpu.pipeline_mode<synchronous>, transform_indices = @transform_1, window_bounds = array<i64: 8, 128>}, {pipeline_mode = #tpu.pipeline_mode<synchronous>, transform_indices = @transform_2, window_bounds = array<i64: 8, 128>}, {pipeline_mode = #tpu.pipeline_mode<synchronous>, transform_indices = @transform_3, window_bounds = array<i64: 8, 128>}, {pipeline_mode = #tpu.pipeline_mode<synchronous>, transform_indices = @transform_4, window_bounds = array<i64: 8, 128>}, {pipeline_mode = #tpu.pipeline_mode<synchronous>, transform_indices = @transform_5, window_bounds = array<i64: 8, 128>}, {pipeline_mode = #tpu.pipeline_mode<synchronous>, transform_indices = @transform_6, window_bounds = array<i64: 8, 128>}, {pipeline_mode = #tpu.pipeline_mode<synchronous>, transform_indices = @transform_7, window_bounds = array<i64: 8, 128>}, {transform_indices = @transform_8, window_bounds = array<i64: 16, 8, 128>}]} {
    %c0 = arith.constant 0 : index
    %c0_0 = arith.constant 0 : index
    %0 = vector.load %arg1[%c0, %c0_0] : memref<8x128xf32, #tpu.memory_space<vmem>>, vector<8x128xf32>
    %1 = math.sin %0 : vector<8x128xf32>
    %2 = math.cos %0 : vector<8x128xf32>
    %c0_1 = arith.constant 0 : index
    %c0_2 = arith.constant 0 : index
    %3 = vector.load %arg2[%c0_1, %c0_2] : memref<8x128xf32, #tpu.memory_space<vmem>>, vector<1x128xf32>
    %4 = vector.shape_cast %3 : vector<1x128xf32> to vector<1x128xf32>
    %5 = vector.broadcast %4 : vector<1x128xf32> to vector<8x128xf32>
    %c0_3 = arith.constant 0 : index
    %c0_4 = arith.constant 0 : index
    %6 = vector.load %arg3[%c0_3, %c0_4] : memref<8x128xf32, #tpu.memory_space<vmem>>, vector<1x128xf32>
    %7 = vector.shape_cast %6 : vector<1x128xf32> to vector<1x128xf32>
    %8 = vector.broadcast %7 : vector<1x128xf32> to vector<8x128xf32>
    %c0_5 = arith.constant 0 : index
    %c0_6 = arith.constant 0 : index
    %9 = vector.load %arg4[%c0_5, %c0_6] : memref<8x128xf32, #tpu.memory_space<vmem>>, vector<1x128xf32>
    %10 = vector.shape_cast %9 : vector<1x128xf32> to vector<1x128xf32>
    %11 = vector.broadcast %10 : vector<1x128xf32> to vector<8x128xf32>
    %c0_7 = arith.constant 0 : index
    %c0_8 = arith.constant 0 : index
    %12 = vector.load %arg5[%c0_7, %c0_8] : memref<8x128xf32, #tpu.memory_space<vmem>>, vector<1x128xf32>
    %13 = vector.shape_cast %12 : vector<1x128xf32> to vector<1x128xf32>
    %14 = vector.broadcast %13 : vector<1x128xf32> to vector<8x128xf32>
    %c0_9 = arith.constant 0 : index
    %c0_10 = arith.constant 0 : index
    %15 = vector.load %arg6[%c0_9, %c0_10] : memref<8x128xf32, #tpu.memory_space<vmem>>, vector<1x128xf32>
    %16 = vector.shape_cast %15 : vector<1x128xf32> to vector<1x128xf32>
    %17 = vector.broadcast %16 : vector<1x128xf32> to vector<8x128xf32>
    %c0_11 = arith.constant 0 : index
    %c0_12 = arith.constant 0 : index
    %18 = vector.load %arg7[%c0_11, %c0_12] : memref<8x128xf32, #tpu.memory_space<vmem>>, vector<1x128xf32>
    %19 = vector.shape_cast %18 : vector<1x128xf32> to vector<1x128xf32>
    %20 = vector.broadcast %19 : vector<1x128xf32> to vector<8x128xf32>
    %c0_13 = arith.constant 0 : index
    %c0_14 = arith.constant 0 : index
    %21 = vector.load %arg8[%c0_13, %c0_14] : memref<8x128xf32, #tpu.memory_space<vmem>>, vector<1x128xf32>
    %22 = vector.shape_cast %21 : vector<1x128xf32> to vector<1x128xf32>
    %23 = vector.broadcast %22 : vector<1x128xf32> to vector<8x128xf32>
    %24 = arith.mulf %2, %14 : vector<8x128xf32>
    %25 = arith.mulf %1, %14 : vector<8x128xf32>
    %26 = arith.mulf %2, %11 : vector<8x128xf32>
    %27 = arith.mulf %1, %11 : vector<8x128xf32>
    %cst = arith.constant 0.000000e+00 : f32
    %28 = vector.broadcast %cst : f32 to vector<8x128xf32>
    %cst_15 = arith.constant 1.000000e+00 : f32
    %29 = vector.broadcast %cst_15 : f32 to vector<8x128xf32>
    %c0_16 = arith.constant 0 : index
    %c0_17 = arith.constant 0 : index
    %c0_18 = arith.constant 0 : index
    %30 = vector.load %arg9[%c0_16, %c0_17, %c0_18] : memref<16x8x128xf32, #tpu.memory_space<vmem>>, vector<1x8x128xf32>
    %31 = vector.shape_cast %30 : vector<1x8x128xf32> to vector<8x128xf32>
    %32 = vector.shape_cast %24 : vector<8x128xf32> to vector<1x8x128xf32>
    tpu.vector_store %arg9[%c0_16, %c0_17, %c0_18], %32 {strides = array<i32>} : memref<16x8x128xf32, #tpu.memory_space<vmem>>, vector<1x8x128xf32>,
    %33 = arith.mulf %26, %5 : vector<8x128xf32>
    %34 = arith.mulf %1, %8 : vector<8x128xf32>
    %35 = arith.subf %33, %34 : vector<8x128xf32>
    %c1 = arith.constant 1 : index
    %c0_19 = arith.constant 0 : index
    %c0_20 = arith.constant 0 : index
    %36 = vector.load %arg9[%c1, %c0_19, %c0_20] : memref<16x8x128xf32, #tpu.memory_space<vmem>>, vector<1x8x128xf32>
    %37 = vector.shape_cast %36 : vector<1x8x128xf32> to vector<8x128xf32>
    %38 = vector.shape_cast %35 : vector<8x128xf32> to vector<1x8x128xf32>
    tpu.vector_store %arg9[%c1, %c0_19, %c0_20], %38 {strides = array<i32>} : memref<16x8x128xf32, #tpu.memory_space<vmem>>, vector<1x8x128xf32>,
    %39 = arith.mulf %26, %8 : vector<8x128xf32>
    %40 = arith.mulf %1, %5 : vector<8x128xf32>
    %41 = arith.addf %39, %40 : vector<8x128xf32>
    %c2 = arith.constant 2 : index
    %c0_21 = arith.constant 0 : index
    %c0_22 = arith.constant 0 : index
    %42 = vector.load %arg9[%c2, %c0_21, %c0_22] : memref<16x8x128xf32, #tpu.memory_space<vmem>>, vector<1x8x128xf32>
    %43 = vector.shape_cast %42 : vector<1x8x128xf32> to vector<8x128xf32>
    %44 = vector.shape_cast %41 : vector<8x128xf32> to vector<1x8x128xf32>
    tpu.vector_store %arg9[%c2, %c0_21, %c0_22], %44 {strides = array<i32>} : memref<16x8x128xf32, #tpu.memory_space<vmem>>, vector<1x8x128xf32>,
    %45 = arith.mulf %24, %17 : vector<8x128xf32>
    %46 = arith.mulf %1, %20 : vector<8x128xf32>
    %47 = arith.subf %45, %46 : vector<8x128xf32>
    %c3 = arith.constant 3 : index
    %c0_23 = arith.constant 0 : index
    %c0_24 = arith.constant 0 : index
    %48 = vector.load %arg9[%c3, %c0_23, %c0_24] : memref<16x8x128xf32, #tpu.memory_space<vmem>>, vector<1x8x128xf32>
    %49 = vector.shape_cast %48 : vector<1x8x128xf32> to vector<8x128xf32>
    %50 = vector.shape_cast %47 : vector<8x128xf32> to vector<1x8x128xf32>
    tpu.vector_store %arg9[%c3, %c0_23, %c0_24], %50 {strides = array<i32>} : memref<16x8x128xf32, #tpu.memory_space<vmem>>, vector<1x8x128xf32>,
    %c4 = arith.constant 4 : index
    %c0_25 = arith.constant 0 : index
    %c0_26 = arith.constant 0 : index
    %51 = vector.load %arg9[%c4, %c0_25, %c0_26] : memref<16x8x128xf32, #tpu.memory_space<vmem>>, vector<1x8x128xf32>
    %52 = vector.shape_cast %51 : vector<1x8x128xf32> to vector<8x128xf32>
    %53 = vector.shape_cast %25 : vector<8x128xf32> to vector<1x8x128xf32>
    tpu.vector_store %arg9[%c4, %c0_25, %c0_26], %53 {strides = array<i32>} : memref<16x8x128xf32, #tpu.memory_space<vmem>>, vector<1x8x128xf32>,
    %54 = arith.mulf %27, %5 : vector<8x128xf32>
    %55 = arith.mulf %2, %8 : vector<8x128xf32>
    %56 = arith.addf %54, %55 : vector<8x128xf32>
    %c5 = arith.constant 5 : index
    %c0_27 = arith.constant 0 : index
    %c0_28 = arith.constant 0 : index
    %57 = vector.load %arg9[%c5, %c0_27, %c0_28] : memref<16x8x128xf32, #tpu.memory_space<vmem>>, vector<1x8x128xf32>
    %58 = vector.shape_cast %57 : vector<1x8x128xf32> to vector<8x128xf32>
    %59 = vector.shape_cast %56 : vector<8x128xf32> to vector<1x8x128xf32>
    tpu.vector_store %arg9[%c5, %c0_27, %c0_28], %59 {strides = array<i32>} : memref<16x8x128xf32, #tpu.memory_space<vmem>>, vector<1x8x128xf32>,
    %60 = arith.mulf %27, %8 : vector<8x128xf32>
    %61 = arith.mulf %2, %5 : vector<8x128xf32>
    %62 = arith.subf %60, %61 : vector<8x128xf32>
    %c6 = arith.constant 6 : index
    %c0_29 = arith.constant 0 : index
    %c0_30 = arith.constant 0 : index
    %63 = vector.load %arg9[%c6, %c0_29, %c0_30] : memref<16x8x128xf32, #tpu.memory_space<vmem>>, vector<1x8x128xf32>
    %64 = vector.shape_cast %63 : vector<1x8x128xf32> to vector<8x128xf32>
    %65 = vector.shape_cast %62 : vector<8x128xf32> to vector<1x8x128xf32>
    tpu.vector_store %arg9[%c6, %c0_29, %c0_30], %65 {strides = array<i32>} : memref<16x8x128xf32, #tpu.memory_space<vmem>>, vector<1x8x128xf32>,
    %66 = arith.mulf %25, %17 : vector<8x128xf32>
    %67 = arith.mulf %2, %20 : vector<8x128xf32>
    %68 = arith.addf %66, %67 : vector<8x128xf32>
    %c7 = arith.constant 7 : index
    %c0_31 = arith.constant 0 : index
    %c0_32 = arith.constant 0 : index
    %69 = vector.load %arg9[%c7, %c0_31, %c0_32] : memref<16x8x128xf32, #tpu.memory_space<vmem>>, vector<1x8x128xf32>
    %70 = vector.shape_cast %69 : vector<1x8x128xf32> to vector<8x128xf32>
    %71 = vector.shape_cast %68 : vector<8x128xf32> to vector<1x8x128xf32>
    tpu.vector_store %arg9[%c7, %c0_31, %c0_32], %71 {strides = array<i32>} : memref<16x8x128xf32, #tpu.memory_space<vmem>>, vector<1x8x128xf32>,
    %cst_33 = arith.constant 0.000000e+00 : f32
    %72 = vector.broadcast %cst_33 : f32 to vector<8x128xf32>
    %73 = arith.subf %72, %11 : vector<8x128xf32>
    %c8 = arith.constant 8 : index
    %c0_34 = arith.constant 0 : index
    %c0_35 = arith.constant 0 : index
    %74 = vector.load %arg9[%c8, %c0_34, %c0_35] : memref<16x8x128xf32, #tpu.memory_space<vmem>>, vector<1x8x128xf32>
    %75 = vector.shape_cast %74 : vector<1x8x128xf32> to vector<8x128xf32>
    %76 = vector.shape_cast %73 : vector<8x128xf32> to vector<1x8x128xf32>
    tpu.vector_store %arg9[%c8, %c0_34, %c0_35], %76 {strides = array<i32>} : memref<16x8x128xf32, #tpu.memory_space<vmem>>, vector<1x8x128xf32>,
    %77 = arith.mulf %14, %5 : vector<8x128xf32>
    %c9 = arith.constant 9 : index
    %c0_36 = arith.constant 0 : index
    %c0_37 = arith.constant 0 : index
    %78 = vector.load %arg9[%c9, %c0_36, %c0_37] : memref<16x8x128xf32, #tpu.memory_space<vmem>>, vector<1x8x128xf32>
    %79 = vector.shape_cast %78 : vector<1x8x128xf32> to vector<8x128xf32>
    %80 = vector.shape_cast %77 : vector<8x128xf32> to vector<1x8x128xf32>
    tpu.vector_store %arg9[%c9, %c0_36, %c0_37], %80 {strides = array<i32>} : memref<16x8x128xf32, #tpu.memory_space<vmem>>, vector<1x8x128xf32>,
    %81 = arith.mulf %14, %8 : vector<8x128xf32>
    %c10 = arith.constant 10 : index
    %c0_38 = arith.constant 0 : index
    %c0_39 = arith.constant 0 : index
    %82 = vector.load %arg9[%c10, %c0_38, %c0_39] : memref<16x8x128xf32, #tpu.memory_space<vmem>>, vector<1x8x128xf32>
    %83 = vector.shape_cast %82 : vector<1x8x128xf32> to vector<8x128xf32>
    %84 = vector.shape_cast %81 : vector<8x128xf32> to vector<1x8x128xf32>
    tpu.vector_store %arg9[%c10, %c0_38, %c0_39], %84 {strides = array<i32>} : memref<16x8x128xf32, #tpu.memory_space<vmem>>, vector<1x8x128xf32>,
    %85 = arith.mulf %11, %17 : vector<8x128xf32>
    %86 = arith.subf %23, %85 : vector<8x128xf32>
    %c11 = arith.constant 11 : index
    %c0_40 = arith.constant 0 : index
    %c0_41 = arith.constant 0 : index
    %87 = vector.load %arg9[%c11, %c0_40, %c0_41] : memref<16x8x128xf32, #tpu.memory_space<vmem>>, vector<1x8x128xf32>
    %88 = vector.shape_cast %87 : vector<1x8x128xf32> to vector<8x128xf32>
    %89 = vector.shape_cast %86 : vector<8x128xf32> to vector<1x8x128xf32>
    tpu.vector_store %arg9[%c11, %c0_40, %c0_41], %89 {strides = array<i32>} : memref<16x8x128xf32, #tpu.memory_space<vmem>>, vector<1x8x128xf32>,
    %c12 = arith.constant 12 : index
    %c0_42 = arith.constant 0 : index
    %c0_43 = arith.constant 0 : index
    %90 = vector.load %arg9[%c12, %c0_42, %c0_43] : memref<16x8x128xf32, #tpu.memory_space<vmem>>, vector<1x8x128xf32>
    %91 = vector.shape_cast %90 : vector<1x8x128xf32> to vector<8x128xf32>
    %92 = vector.shape_cast %28 : vector<8x128xf32> to vector<1x8x128xf32>
    tpu.vector_store %arg9[%c12, %c0_42, %c0_43], %92 {strides = array<i32>} : memref<16x8x128xf32, #tpu.memory_space<vmem>>, vector<1x8x128xf32>,
    %c13 = arith.constant 13 : index
    %c0_44 = arith.constant 0 : index
    %c0_45 = arith.constant 0 : index
    %93 = vector.load %arg9[%c13, %c0_44, %c0_45] : memref<16x8x128xf32, #tpu.memory_space<vmem>>, vector<1x8x128xf32>
    %94 = vector.shape_cast %93 : vector<1x8x128xf32> to vector<8x128xf32>
    %95 = vector.shape_cast %28 : vector<8x128xf32> to vector<1x8x128xf32>
    tpu.vector_store %arg9[%c13, %c0_44, %c0_45], %95 {strides = array<i32>} : memref<16x8x128xf32, #tpu.memory_space<vmem>>, vector<1x8x128xf32>,
    %c14 = arith.constant 14 : index
    %c0_46 = arith.constant 0 : index
    %c0_47 = arith.constant 0 : index
    %96 = vector.load %arg9[%c14, %c0_46, %c0_47] : memref<16x8x128xf32, #tpu.memory_space<vmem>>, vector<1x8x128xf32>
    %97 = vector.shape_cast %96 : vector<1x8x128xf32> to vector<8x128xf32>
    %98 = vector.shape_cast %28 : vector<8x128xf32> to vector<1x8x128xf32>
    tpu.vector_store %arg9[%c14, %c0_46, %c0_47], %98 {strides = array<i32>} : memref<16x8x128xf32, #tpu.memory_space<vmem>>, vector<1x8x128xf32>,
    %c15 = arith.constant 15 : index
    %c0_48 = arith.constant 0 : index
    %c0_49 = arith.constant 0 : index
    %99 = vector.load %arg9[%c15, %c0_48, %c0_49] : memref<16x8x128xf32, #tpu.memory_space<vmem>>, vector<1x8x128xf32>
    %100 = vector.shape_cast %99 : vector<1x8x128xf32> to vector<8x128xf32>
    %101 = vector.shape_cast %29 : vector<8x128xf32> to vector<1x8x128xf32>
    tpu.vector_store %arg9[%c15, %c0_48, %c0_49], %101 {strides = array<i32>} : memref<16x8x128xf32, #tpu.memory_space<vmem>>, vector<1x8x128xf32>,
    return
  }
  func.func @transform_0(%arg0: i32) -> (i32, i32) {
    %c0_i32 = arith.constant 0 : i32
    %c0_i32_0 = arith.constant 0 : i32
    return %arg0, %c0_i32 : i32, i32
  }
  func.func @transform_1(%arg0: i32) -> (i32, i32) {
    %c0_i32 = arith.constant 0 : i32
    %c0_i32_0 = arith.constant 0 : i32
    %c0_i32_1 = arith.constant 0 : i32
    return %c0_i32, %c0_i32_0 : i32, i32
  }
  func.func @transform_2(%arg0: i32) -> (i32, i32) {
    %c0_i32 = arith.constant 0 : i32
    %c0_i32_0 = arith.constant 0 : i32
    %c0_i32_1 = arith.constant 0 : i32
    return %c0_i32, %c0_i32_0 : i32, i32
  }
  func.func @transform_3(%arg0: i32) -> (i32, i32) {
    %c0_i32 = arith.constant 0 : i32
    %c0_i32_0 = arith.constant 0 : i32
    %c0_i32_1 = arith.constant 0 : i32
    return %c0_i32, %c0_i32_0 : i32, i32
  }
  func.func @transform_4(%arg0: i32) -> (i32, i32) {
    %c0_i32 = arith.constant 0 : i32
    %c0_i32_0 = arith.constant 0 : i32
    %c0_i32_1 = arith.constant 0 : i32
    return %c0_i32, %c0_i32_0 : i32, i32
  }
  func.func @transform_5(%arg0: i32) -> (i32, i32) {
    %c0_i32 = arith.constant 0 : i32
    %c0_i32_0 = arith.constant 0 : i32
    %c0_i32_1 = arith.constant 0 : i32
    return %c0_i32, %c0_i32_0 : i32, i32
  }
  func.func @transform_6(%arg0: i32) -> (i32, i32) {
    %c0_i32 = arith.constant 0 : i32
    %c0_i32_0 = arith.constant 0 : i32
    %c0_i32_1 = arith.constant 0 : i32
    return %c0_i32, %c0_i32_0 : i32, i32
  }
  func.func @transform_7(%arg0: i32) -> (i32, i32) {
    %c0_i32 = arith.constant 0 : i32
    %c0_i32_0 = arith.constant 0 : i32
    %c0_i32_1 = arith.constant 0 : i32
    return %c0_i32, %c0_i32_0 : i32, i32
  }
  func.func @transform_8(%arg0: i32) -> (i32, i32, i32) {
    %c0_i32 = arith.constant 0 : i32
    %c0_i32_0 = arith.constant 0 : i32
    %c0_i32_1 = arith.constant 0 : i32
    return %c0_i32, %arg0, %c0_i32_0 : i32, i32, i32
  }
}

</mosaic_0001>

<llo_original>
// kernel: tile.53
$region0: #{tile.53}
  #allocation0 [shape = 's32[1]{0}', space=sflag, size = 0x4, scoped, tag = 'scoped memory for tile.53']
  %s0 = inlined_call_operand.vmem [shape: f32[8], index: 0, kind: input, shape index: {}]
  %s1 = inlined_call_operand.vmem [shape: f32[16,8], index: 1, kind: output, shape index: {}]
  // Predicated region
  $region2: #{tile.53} parent=0 // pred_check
    _
  $region3: #{tile.53} parent=0 // pred_check_branch
    %3 = sbr.rel (0) target = $region5
  $region4: #{tile.53} parent=0 // pred_region
    _
  $region5: #{tile.53} parent=0 // pred_fallthru
    _
  %v4 = vld [vmem:[%s0] ss:$0 sm:$0xff]
  %5 = vst [vmem:[%s1] sm:$0xff] %v4
  %s6 = scalar_lea.vmem %s1, 8
  %7 = vst [vmem:[%s6] sm:$0xff] %v4

// kernel: dh_layer_forward.1
$region0: #{dh_layer_forward.1}
  #allocation0 [shape = 'u32[]', space=smem, size = 0x4, offset = 0x4, fixed_abs, tag = 'smem constant byte address 0x4 - core index']
  #allocation1 [shape = 'u32[144,128]{1,0:T(1,128)}', space=vmem, size = 0x12000, scoped, tag = 'internal scratch']
  %s0 = inlined_call_operand.vmem [shape: f32[8,128], index: 0, kind: input, shape index: {}]
  %s1 = inlined_call_operand.vmem [shape: f32[8,128], index: 1, kind: input, shape index: {}]
  %s2 = inlined_call_operand.vmem [shape: f32[8,128], index: 2, kind: input, shape index: {}]
  %s3 = inlined_call_operand.vmem [shape: f32[8,128], index: 3, kind: input, shape index: {}]
  %s4 = inlined_call_operand.vmem [shape: f32[8,128], index: 4, kind: input, shape index: {}]
  %s5 = inlined_call_operand.vmem [shape: f32[8,128], index: 5, kind: input, shape index: {}]
  %s6 = inlined_call_operand.vmem [shape: f32[8,128], index: 6, kind: input, shape index: {}]
  %s7 = inlined_call_operand.vmem [shape: f32[8,128], index: 7, kind: input, shape index: {}]
  %s8 = inlined_call_operand.vmem [shape: f32[16,8,128], index: 8, kind: output, shape index: {}]
  %s9 = sld [smem:[#allocation0]]
  $region42: #{dh_layer_forward.1} parent=0
    _
  %s11 = ssub.s32 1, %s9
  %s12 = scalar_select 0, %s11, %s9
  // Predicated region
  $region2: #{dh_layer_forward.1} parent=0 // pred_check
    _
  $region3: #{dh_layer_forward.1} parent=0 // pred_check_branch
    %14 = sbr.rel (0) target = $region5
  $region4: #{dh_layer_forward.1} parent=0 // pred_region
    _
  $region5: #{dh_layer_forward.1} parent=0 // pred_fallthru
    _
  // Predicated region
  $region6: #{dh_layer_forward.1} parent=0 // pred_check
    _
  $region7: #{dh_layer_forward.1} parent=0 // pred_check_branch
    %16 = sbr.rel (0) target = $region9
  $region8: #{dh_layer_forward.1} parent=0 // pred_region
    _
  $region9: #{dh_layer_forward.1} parent=0 // pred_fallthru
    _
  // Predicated region
  $region10: #{dh_layer_forward.1} parent=0 // pred_check
    _
  $region11: #{dh_layer_forward.1} parent=0 // pred_check_branch
    %18 = sbr.rel (0) target = $region13
  $region12: #{dh_layer_forward.1} parent=0 // pred_region
    _
  $region13: #{dh_layer_forward.1} parent=0 // pred_fallthru
    _
  // Predicated region
  $region14: #{dh_layer_forward.1} parent=0 // pred_check
    _
  $region15: #{dh_layer_forward.1} parent=0 // pred_check_branch
    %20 = sbr.rel (0) target = $region17
  $region16: #{dh_layer_forward.1} parent=0 // pred_region
    _
  $region17: #{dh_layer_forward.1} parent=0 // pred_fallthru
    _
  // Predicated region
  $region18: #{dh_layer_forward.1} parent=0 // pred_check
    _
  $region19: #{dh_layer_forward.1} parent=0 // pred_check_branch
    %22 = sbr.rel (0) target = $region21
  $region20: #{dh_layer_forward.1} parent=0 // pred_region
    _
  $region21: #{dh_layer_forward.1} parent=0 // pred_fallthru
    _
  // Predicated region
  $region22: #{dh_layer_forward.1} parent=0 // pred_check
    _
  $region23: #{dh_layer_forward.1} parent=0 // pred_check_branch
    %24 = sbr.rel (0) target = $region25
  $region24: #{dh_layer_forward.1} parent=0 // pred_region
    _
  $region25: #{dh_layer_forward.1} parent=0 // pred_fallthru
    _
  // Predicated region
  $region26: #{dh_layer_forward.1} parent=0 // pred_check
    _
  $region27: #{dh_layer_forward.1} parent=0 // pred_check_branch
    %26 = sbr.rel (0) target = $region29
  $region28: #{dh_layer_forward.1} parent=0 // pred_region
    _
  $region29: #{dh_layer_forward.1} parent=0 // pred_fallthru
    _
  // Predicated region
  $region30: #{dh_layer_forward.1} parent=0 // pred_check
    _
  $region31: #{dh_layer_forward.1} parent=0 // pred_check_branch
    %28 = sbr.rel (0) target = $region33
  $region32: #{dh_layer_forward.1} parent=0 // pred_region
    _
  $region33: #{dh_layer_forward.1} parent=0 // pred_fallthru
    _
  %v29 = vld [vmem:[%s0] sm:$0xff]
  %v30 = vand.u32 2147483647, %v29
  %vm31 = vcmp.le.f32.partialorder %v30, 0.7853982
  %vm32 = vcmp.lt.s32.totalorder %v29, 0
  %v33 = vand.u32 %v29, 2139095040
  %v34 = vshrl.u32 %v33, 23
  %v35 = vsub.s32 %v34, 127
  %v36 = vand.u32 2147483647, %v29
  %v37 = vand.u32 %v36, 8388607
  %v38 = vor.u32 %v37, 8388608
  %v39 = vsub.s32 0, %v38
  %v40 = vadd.s32 %v35, 1
  %vm41 = vcmp.gt.s32.totalorder %v40, 0
  %v42 = vsel %vm41, %v40, 0
  %v43 = vshrl.u32 %v42, 5
  %v44 = vand.u32 %v42, 31
  %v45 = vsub.s32 32, %v44
  %v46 = vshrl.u32 683565275, %v45
  %v47 = vshll.u32 683565275, %v44
  %v48 = vshrl.u32 2475754826, %v45
  %v49 = vor.u32 %v47, %v48
  %v50 = vshll.u32 2475754826, %v44
  %v51 = vshrl.u32 2131351028, %v45
  %v52 = vor.u32 %v50, %v51
  %v53 = vshll.u32 2131351028, %v44
  %v54 = vshrl.u32 2102212464, %v45
  %v55 = vor.u32 %v53, %v54
  %v56 = vshll.u32 2102212464, %v44
  %v57 = vshrl.u32 920167782, %v45
  %v58 = vor.u32 %v56, %v57
  %v59 = vshll.u32 920167782, %v44
  %v60 = vshrl.u32 1326507024, %v45
  %v61 = vor.u32 %v59, %v60
  %vm62 = vcmp.lt.s32.totalorder %v43, 1
  %vm63 = vcmp.lt.s32.totalorder %v43, 2
  %vm64 = vcmp.lt.s32.totalorder %v43, 3
  %vm65 = vcmp.lt.s32.totalorder %v43, 4
  %v66 = vsel %vm62, %v46, %v49
  %v67 = vsel %vm65, %v55, 2102212464
  %v68 = vsel %vm64, %v52, %v67
  %v69 = vsel %vm63, %v66, %v68
  %v70 = vsel %vm62, %v49, %v52
  %v71 = vsel %vm65, %v58, 920167782
  %v72 = vsel %vm64, %v55, %v71
  %v73 = vsel %vm63, %v70, %v72
  %v74 = vsel %vm62, %v52, %v55
  %v75 = vsel %vm65, %v61, 1326507024
  %v76 = vsel %vm64, %v58, %v75
  %v77 = vsel %vm63, %v74, %v76
  %v78 = vshll.u32 %v38, 8
  %v79 = vmul.u32.u64.compose %v78, %v77
  %v80 = vextract.low.u32 %v79
  %v81 = vextract.high.u32 %v79
  %v82 = vmul.u32.u64.compose %v78, %v73
  %v83 = vextract.low.u32 %v82
  %v84 = vextract.high.u32 %v82
  %v85 = vmul.u32 %v78, %v69
  %v86 = vadd.s32 %v81, %v83
  %vm87 = vc.u32 %v81, %v83
  %v88 = vadd.s32 %v84, 1
  %v89 = vsel %vm87, %v88, %v84
  %v90 = vadd.s32 %v85, %v89
  %v91 = vadd.s32 %v90, 536870912
  %v92 = vshrl.u32 %v91, 30
  %v93 = vshll.u32 %v92, 30
  %v94 = vsub.s32 %v90, %v93
  %vm95 = vcmp.lt.s32.totalorder %v94, 0
  %v96 = vsub.s32 0, %v94
  %v97 = vsel %vm95, %v96, %v94
  %v98 = vclz %v97
  %v99 = vsub.s32 %v98, 2
  %vm100 = vcmp.gt.s32.totalorder 0, %v99
  %v101 = vsel %vm100, 0, %v99
  %v102 = vsub.s32 32, %v101
  %v103 = vshll.u32 %v94, %v101
  %v104 = vshrl.u32 %v86, %v102
  %v105 = vor.u32 %v103, %v104
  %v106 = vsub.s32 4294967266, %v101
  %v107 = vadd.s32 %v106, 127
  %v108 = vshll.u32 %v107, 23
  %v109 = vor.u32 4788187, %v108
  %v110 = vand.u32 2147483647, %v109
  %v112 = vcvt.s32.f32 %v105
  %v113 = vmul.f32 %v112, %v110
  %v114 = vxor.u32 %v113, 2147483648
  %v115 = vsel %vm32, %v114, %v113
  %v116 = vsub.s32 4, %v92
  %v117 = vsel %vm32, %v116, %v92
  %v118 = vsel %vm31, %v29, %v115
  %v119 = vsel %vm31, 0, %v117
  %v120 = vcosq.f32.pop %v118
  %v121 = vsinq.f32.pop %v118
  %vm122 = vweird.f32 %v29
  %v123 = vadd.s32 %v119, 3
  %v124 = vand.u32 %v123, 3
  %vm125 = vcmp.lt.s32.totalorder %v124, 2
  %vm126 = vcmp.eq.s32.totalorder %v124, 0
  %v127 = vxor.u32 %v121, 2147483648
  %v128 = vsel %vm126, %v120, %v127
  %vm129 = vcmp.eq.s32.totalorder %v124, 2
  %v130 = vxor.u32 %v120, 2147483648
  %v131 = vsel %vm129, %v130, %v121
  %v132 = vsel %vm125, %v128, %v131
  %v133 = vsel %vm122, nan, %v132
  %v134 = vand.u32 2147483647, %v29
  %vm135 = vcmp.le.f32.partialorder %v134, 0.7853982
  %vm136 = vcmp.lt.s32.totalorder %v29, 0
  %v137 = vand.u32 %v29, 2139095040
  %v138 = vshrl.u32 %v137, 23
  %v139 = vsub.s32 %v138, 127
  %v140 = vand.u32 2147483647, %v29
  %v141 = vand.u32 %v140, 8388607
  %v142 = vor.u32 %v141, 8388608
  %v143 = vsub.s32 0, %v142
  %v144 = vadd.s32 %v139, 1
  %vm145 = vcmp.gt.s32.totalorder %v144, 0
  %v146 = vsel %vm145, %v144, 0
  %v147 = vshrl.u32 %v146, 5
  %v148 = vand.u32 %v146, 31
  %v149 = vsub.s32 32, %v148
  %v150 = vshrl.u32 683565275, %v149
  %v151 = vshll.u32 683565275, %v148
  %v152 = vshrl.u32 2475754826, %v149
  %v153 = vor.u32 %v151, %v152
  %v154 = vshll.u32 2475754826, %v148
  %v155 = vshrl.u32 2131351028, %v149
  %v156 = vor.u32 %v154, %v155
  %v157 = vshll.u32 2131351028, %v148
  %v158 = vshrl.u32 2102212464, %v149
  %v159 = vor.u32 %v157, %v158
  %v160 = vshll.u32 2102212464, %v148
  %v161 = vshrl.u32 920167782, %v149
  %v162 = vor.u32 %v160, %v161
  %v163 = vshll.u32 920167782, %v148
  %v164 = vshrl.u32 1326507024, %v149
  %v165 = vor.u32 %v163, %v164
  %vm166 = vcmp.lt.s32.totalorder %v147, 1
  %vm167 = vcmp.lt.s32.totalorder %v147, 2
  %vm168 = vcmp.lt.s32.totalorder %v147, 3
  %vm169 = vcmp.lt.s32.totalorder %v147, 4
  %v170 = vsel %vm166, %v150, %v153
  %v171 = vsel %vm169, %v159, 2102212464
  %v172 = vsel %vm168, %v156, %v171
  %v173 = vsel %vm167, %v170, %v172
  %v174 = vsel %vm166, %v153, %v156
  %v175 = vsel %vm169, %v162, 920167782
  %v176 = vsel %vm168, %v159, %v175
  %v177 = vsel %vm167, %v174, %v176
  %v178 = vsel %vm166, %v156, %v159
  %v179 = vsel %vm169, %v165, 1326507024
  %v180 = vsel %vm168, %v162, %v179
  %v181 = vsel %vm167, %v178, %v180
  %v182 = vshll.u32 %v142, 8
  %v183 = vmul.u32.u64.compose %v182, %v181
  %v184 = vextract.low.u32 %v183
  %v185 = vextract.high.u32 %v183
  %v186 = vmul.u32.u64.compose %v182, %v177
  %v187 = vextract.low.u32 %v186
  %v188 = vextract.high.u32 %v186
  %v189 = vmul.u32 %v182, %v173
  %v190 = vadd.s32 %v185, %v187
  %vm191 = vc.u32 %v185, %v187
  %v192 = vadd.s32 %v188, 1
  %v193 = vsel %vm191, %v192, %v188
  %v194 = vadd.s32 %v189, %v193
  %v195 = vadd.s32 %v194, 536870912
  %v196 = vshrl.u32 %v195, 30
  %v197 = vshll.u32 %v196, 30
  %v198 = vsub.s32 %v194, %v197
  %vm199 = vcmp.lt.s32.totalorder %v198, 0
  %v200 = vsub.s32 0, %v198
  %v201 = vsel %vm199, %v200, %v198
  %v202 = vclz %v201
  %v203 = vsub.s32 %v202, 2
  %vm204 = vcmp.gt.s32.totalorder 0, %v203
  %v205 = vsel %vm204, 0, %v203
  %v206 = vsub.s32 32, %v205
  %v207 = vshll.u32 %v198, %v205
  %v208 = vshrl.u32 %v190, %v206
  %v209 = vor.u32 %v207, %v208
  %v210 = vsub.s32 4294967266, %v205
  %v211 = vadd.s32 %v210, 127
  %v212 = vshll.u32 %v211, 23
  %v213 = vor.u32 4788187, %v212
  %v214 = vand.u32 2147483647, %v213
  %v216 = vcvt.s32.f32 %v209
  %v217 = vmul.f32 %v216, %v214
  %v218 = vxor.u32 %v217, 2147483648
  %v219 = vsel %vm136, %v218, %v217
  %v220 = vsub.s32 4, %v196
  %v221 = vsel %vm136, %v220, %v196
  %v222 = vsel %vm135, %v29, %v219
  %v223 = vsel %vm135, 0, %v221
  %v224 = vcosq.f32.pop %v222
  %v225 = vsinq.f32.pop %v222
  %vm226 = vweird.f32 %v29
  %v227 = vand.u32 %v223, 3
  %vm228 = vcmp.lt.s32.totalorder %v227, 2
  %vm229 = vcmp.eq.s32.totalorder %v227, 0
  %v230 = vxor.u32 %v225, 2147483648
  %v231 = vsel %vm229, %v224, %v230
  %vm232 = vcmp.eq.s32.totalorder %v227, 2
  %v233 = vxor.u32 %v224, 2147483648
  %v234 = vsel %vm232, %v233, %v225
  %v235 = vsel %vm228, %v231, %v234
  %v236 = vsel %vm226, nan, %v235
  %v237 = vld [vmem:[%s1] sm:$0x1]
  %v238 = vlaneseq
  %v239 = vshrl.u32 %v238, 7
  %v240 = vsub.s32 0, %v239
  %v241 = vrot.slane %v237, %v240
  %v242 = vld [vmem:[%s2] sm:$0x1]
  %v243 = vlaneseq
  %v244 = vshrl.u32 %v243, 7
  %v245 = vsub.s32 0, %v244
  %v246 = vrot.slane %v242, %v245
  %v247 = vld [vmem:[%s3] sm:$0x1]
  %v248 = vlaneseq
  %v249 = vshrl.u32 %v248, 7
  %v250 = vsub.s32 0, %v249
  %v251 = vrot.slane %v247, %v250
  %v252 = vld [vmem:[%s4] sm:$0x1]
  %v253 = vlaneseq
  %v254 = vshrl.u32 %v253, 7
  %v255 = vsub.s32 0, %v254
  %v256 = vrot.slane %v252, %v255
  %v257 = vld [vmem:[%s5] sm:$0x1]
  %v258 = vlaneseq
  %v259 = vshrl.u32 %v258, 7
  %v260 = vsub.s32 0, %v259
  %v261 = vrot.slane %v257, %v260
  %v262 = vld [vmem:[%s6] sm:$0x1]
  %v263 = vlaneseq
  %v264 = vshrl.u32 %v263, 7
  %v265 = vsub.s32 0, %v264
  %v266 = vrot.slane %v262, %v265
  %v267 = vld [vmem:[%s7] sm:$0x1]
  %v268 = vlaneseq
  %v269 = vshrl.u32 %v268, 7
  %v270 = vsub.s32 0, %v269
  %v271 = vrot.slane %v267, %v270
  %v272 = vmul.f32 %v236, %v256
  %v273 = vmul.f32 %v133, %v256
  %v274 = vmul.f32 %v236, %v251
  %v275 = vmul.f32 %v133, %v251
  %276 = vst [vmem:[%s8] sm:$0xff] %v272
  %v277 = vmul.f32 %v274, %v241
  %v278 = vmul.f32 %v133, %v246
  %v279 = vsub.f32 %v277, %v278
  %s280 = scalar_lea.vmem %s8, 8
  %281 = vst [vmem:[%s280] sm:$0xff] %v279
  %v282 = vmul.f32 %v274, %v246
  %v283 = vmul.f32 %v133, %v241
  %v284 = vadd.f32 %v282, %v283
  %s285 = scalar_lea.vmem %s8, 16
  %286 = vst [vmem:[%s285] sm:$0xff] %v284
  %v287 = vmul.f32 %v272, %v261
  %v288 = vmul.f32 %v133, %v266
  %v289 = vsub.f32 %v287, %v288
  %s290 = scalar_lea.vmem %s8, 24
  %291 = vst [vmem:[%s290] sm:$0xff] %v289
  %s292 = scalar_lea.vmem %s8, 32
  %293 = vst [vmem:[%s292] sm:$0xff] %v273
  %v294 = vmul.f32 %v275, %v241
  %v295 = vmul.f32 %v236, %v246
  %v296 = vadd.f32 %v294, %v295
  %s297 = scalar_lea.vmem %s8, 40
  %298 = vst [vmem:[%s297] sm:$0xff] %v296
  %v299 = vmul.f32 %v275, %v246
  %v300 = vmul.f32 %v236, %v241
  %v301 = vsub.f32 %v299, %v300
  %s302 = scalar_lea.vmem %s8, 48
  %303 = vst [vmem:[%s302] sm:$0xff] %v301
  %v304 = vmul.f32 %v273, %v261
  %v305 = vmul.f32 %v236, %v266
  %v306 = vadd.f32 %v304, %v305
  %s307 = scalar_lea.vmem %s8, 56
  %308 = vst [vmem:[%s307] sm:$0xff] %v306
  %v309 = vsub.f32 0.0, %v251
  %s310 = scalar_lea.vmem %s8, 64
  %311 = vst [vmem:[%s310] sm:$0xff] %v309
  %v312 = vmul.f32 %v256, %v241
  %s313 = scalar_lea.vmem %s8, 72
  %314 = vst [vmem:[%s313] sm:$0xff] %v312
  %v315 = vmul.f32 %v256, %v246
  %s316 = scalar_lea.vmem %s8, 80
  %317 = vst [vmem:[%s316] sm:$0xff] %v315
  %v318 = vmul.f32 %v251, %v261
  %v319 = vsub.f32 %v271, %v318
  %s320 = scalar_lea.vmem %s8, 88
  %321 = vst [vmem:[%s320] sm:$0xff] %v319
  %s322 = scalar_lea.vmem %s8, 96
  %323 = vst [vmem:[%s322] sm:$0xff] 0.0
  %s324 = scalar_lea.vmem %s8, 104
  %325 = vst [vmem:[%s324] sm:$0xff] 0.0
  %s326 = scalar_lea.vmem %s8, 112
  %327 = vst [vmem:[%s326] sm:$0xff] 0.0
  %s328 = scalar_lea.vmem %s8, 120
  %329 = vst [vmem:[%s328] sm:$0xff] 1.0
  // Predicated region
  $region34: #{dh_layer_forward.1} parent=0 // pred_check
    _
  $region35: #{dh_layer_forward.1} parent=0 // pred_check_branch
    %331 = sbr.rel (0) target = $region37
  $region36: #{dh_layer_forward.1} parent=0 // pred_region
    _
  $region37: #{dh_layer_forward.1} parent=0 // pred_fallthru
    _
  // Predicated region
  $region38: #{dh_layer_forward.1} parent=0 // pred_check
    _
  $region39: #{dh_layer_forward.1} parent=0 // pred_check_branch
    %333 = sbr.rel (0) target = $region41
  $region40: #{dh_layer_forward.1} parent=0 // pred_region
    _
  $region41: #{dh_layer_forward.1} parent=0 // pred_fallthru
    _

</llo_original>
